<compile_context>
chip_gen: v7x
topology: tpu7x:2x2x1
jax: 0.10.0
libtpu: 0.0.40
codegen_flags: <defaults>
</compile_context>

<pallas_src>
import functools

import jax
import jax.numpy as jnp
from jax.experimental import pallas as pl
from jax.experimental.pallas import tpu as pltpu

H1, H2, A1 = 128, 64, 32          # fc1/fc5 width, fc2/fc4 width, aux hidden width
_SEG = 128                        # every packed tensor gets its own 128-lane segment
# Segment indices inside the single parameter slab (order must match packing).
(_W1, _W2, _W3, _W4, _W5, _W6, _WA1, _WA2,
 _B1, _B2, _B3, _B4, _B5, _B6, _BA1, _BA2) = range(16)
_SLAB_LANES = 16 * _SEG           # (128, 2048) f32 slab == 1 MiB, trivially resident


def _relu(x):
    return jnp.maximum(x, 0.0)


def _sigmoid(x):
    # Stable sigmoid: exponentiate only non-positive arguments; the divide is
    # an approximate EUP reciprocal (rel. err ~2^-12, within the test tolerance).
    e = jnp.exp(-jnp.abs(x))
    r = pl.reciprocal(1.0 + e, approx=True)
    return jnp.where(x >= 0, r, e * r)


def icvae_kernel(xe_ref, p_ref, out_ref, *, input_dim, latent_dim):
    D, L = input_dim, latent_dim

    xe = xe_ref[...]                      # (tb, D+L)  packed [x | eps]
    x = xe[:, :D]
    eps = xe[:, D:D + L]

    def seg(i, rows, cols):               # static, 128-lane-aligned slab slice
        return p_ref[0:rows, i * _SEG:i * _SEG + cols]

    w1 = seg(_W1, D, H1)                  # (D, 128)   fc1
    w2 = seg(_W2, H1, H2)                 # (128, 64)  fc2
    w3 = seg(_W3, H2, 2 * L)              # (64, 2L)   [fc3_mu | fc3_logvar]
    w5 = seg(_W5, H2, H1)                 # (64, 128)  fc5
    w6 = seg(_W6, H1, D)                  # (128, D)   fc6
    wa2 = seg(_WA2, 1, A1)                # (1, 32)    aux[2] weight as a row
    b1 = seg(_B1, 1, H1)
    b2 = seg(_B2, 1, H2)
    b3 = seg(_B3, 1, 2 * L)
    b4 = seg(_B4, 1, H2)
    b5 = seg(_B5, 1, H1)
    b6 = seg(_B6, 1, D)
    ba1 = seg(_BA1, 1, A1)
    ba2 = seg(_BA2, 1, 1)

    # ---- encode (fused mu/logvar head: one MXU matmul instead of two) ----
    h = _relu(jnp.dot(x, w1, preferred_element_type=jnp.float32) + b1)
    h = _relu(jnp.dot(h, w2, preferred_element_type=jnp.float32) + b2)
    muv = jnp.dot(h, w3, preferred_element_type=jnp.float32) + b3     # (tb, 2L)
    mu, logvar = muv[:, :L], muv[:, L:]

    # ---- reparameterize: z = mu + eps * exp(0.5 * logvar) ----
    z = mu + eps * jnp.exp(0.5 * logvar)

    # ---- K = latent_dim contractions on the VPU (outer-product form),
    #      keeping the tiny fc4 / aux[0] matmuls off the MXU latency chain ----
    hd_pre = b4                            # broadcasts to (tb, 64) on first FMA
    a_pre = ba1                            # broadcasts to (tb, 32)
    for k in range(L):                     # static unrolled loop, L <= 8
        w4_row = p_ref[k:k + 1, _W4 * _SEG:_W4 * _SEG + H2]     # (1, 64)
        wa1_row = p_ref[k:k + 1, _WA1 * _SEG:_WA1 * _SEG + A1]  # (1, 32)
        hd_pre = hd_pre + z[:, k:k + 1] * w4_row
        a_pre = a_pre + mu[:, k:k + 1] * wa1_row

    # ---- decode ----
    hd = _relu(hd_pre)
    hd = _relu(jnp.dot(hd, w5, preferred_element_type=jnp.float32) + b5)
    recon = _sigmoid(jnp.dot(hd, w6, preferred_element_type=jnp.float32) + b6)

    # ---- aux network 32->1: VPU multiply + lane reduction ----
    a = _relu(a_pre)
    aux = _sigmoid(jnp.sum(a * wa2, axis=-1, keepdims=True) + ba2)    # (tb, 1)

    # ---- single lane-dense output store: [recon | mu | logvar | aux | 0-pad] ----
    tb = xe.shape[0]
    used = D + 2 * L + 1
    pad = out_ref.shape[-1] - used
    pieces = [recon, muv, aux]
    if pad:
        pieces.append(jnp.zeros((tb, pad), jnp.float32))   # pad lanes written explicitly
    out_ref[...] = jnp.concatenate(pieces, axis=-1)


def pack_icvae_params(params):
    """Pack the 18 (in,out)-layout weights/biases into ONE (128, 2048) slab."""
    (w1, b1, w2, b2, w3m, b3m, w3v, b3v,
     wa1, ba1, wa2, ba2, w4, b4, w5, b5, w6, b6) = params

    def seg(a):
        r, c = a.shape
        assert r <= _SEG and c <= _SEG, (r, c)
        return jnp.pad(a, ((0, _SEG - r), (0, _SEG - c)))

    w3 = jnp.concatenate([w3m, w3v], axis=1)        # (64, 2L) fused head weight
    b3 = jnp.concatenate([b3m, b3v], axis=1)        # (1, 2L)  fused head bias
    order = [w1, w2, w3, w4, w5, w6, wa1, wa2.T,
             b1, b2, b3, b4, b5, b6, ba1, ba2]      # must match _W*/_B* indices
    return jnp.concatenate([seg(t) for t in order], axis=1)   # (128, 2048)


def _pick_batch_tile(B, batch_tile, num_cores):
    """Largest batch tile <= cap that evenly divides B.

    Keeps the grid length >= num_cores when possible (pass num_cores=2 on v7x
    so the 'parallel' axis shards across both TensorCores); on single-TC chips
    (v5e/v6e) the default gives a grid of 1 for B <= batch_tile."""
    cap = max(8, batch_tile)
    if num_cores > 1 and B >= 2 * 8:
        cap = min(cap, max(8, B // num_cores))
    if B <= cap:
        return B                     # grid of 1; full-dim block, any B allowed
    cap -= cap % 8
    for t in range(cap, 7, -8):      # tile must be a multiple of 8 when grid > 1
        if B % t == 0:
            return t
    return B                         # fallback: single tile


@functools.partial(jax.jit, static_argnames=("batch_tile", "num_cores"))
def icvae_forward(x, eps, params, *, batch_tile=1024, num_cores=1):
    """x: (B, input_dim) f32, eps: (B, latent_dim) f32 standard-normal noise."""
    B, D = x.shape
    L = eps.shape[1]
    if D > H1:
        raise ValueError(f"input_dim={D} > 128 not supported by the packed slab")
    if 2 * L > _SEG:
        raise ValueError(f"latent_dim={L} too large")

    tb = _pick_batch_tile(B, batch_tile, num_cores)
    grid = (B // tb,)
    used = D + 2 * L + 1
    out_width = ((used + 127) // 128) * 128        # lane-dense output slab width

    slab = pack_icvae_params(params)               # (128, 2048), one resident DMA
    xe = jnp.concatenate([x, eps], axis=1)         # (B, D+L), one input DMA per tile
    kernel = functools.partial(icvae_kernel, input_dim=D, latent_dim=L)

    out = pl.pallas_call(
        kernel,
        out_shape=jax.ShapeDtypeStruct((B, out_width), jnp.float32),
        grid=grid,
        in_specs=[
            pl.BlockSpec((tb, D + L), lambda i: (i, 0)),          # packed [x|eps]
            pl.BlockSpec((_SEG, _SLAB_LANES), lambda i: (0, 0)),  # resident params
        ],
        out_specs=pl.BlockSpec((tb, out_width), lambda i: (i, 0)),
        compiler_params=pltpu.CompilerParams(
            dimension_semantics=("parallel",)),    # batch tiles shard across TCs
    )(xe, slab)

    recon = out[:, :D]
    mu = out[:, D:D + L]
    logvar = out[:, D + L:D + 2 * L]
    aux = out[:, D + 2 * L:D + 2 * L + 1]
    kl_weight = jnp.mean(aux)                      # batch mean -> scalar kl_weight
    return recon, mu, logvar, kl_weight


def init_linear(key, fan_in, fan_out):
    """PyTorch nn.Linear-style init: U(-1/sqrt(fan_in), 1/sqrt(fan_in)).
    Weight returned as (in, out); bias as (1, out) for in-kernel broadcasting."""
    kw, kb = jax.random.split(key)
    bound = 1.0 / float(jnp.sqrt(jnp.float32(fan_in)))
    w = jax.random.uniform(kw, (fan_in, fan_out), jnp.float32, -bound, bound)
    b = jax.random.uniform(kb, (1, fan_out), jnp.float32, -bound, bound)
    return w, b


def make_icvae_params(key, input_dim, latent_dim):
    keys = jax.random.split(key, 8)
    w1, b1 = init_linear(keys[0], input_dim, 128)        # fc1
    w2, b2 = init_linear(keys[1], 128, 64)               # fc2
    w3m, b3m = init_linear(keys[2], 64, latent_dim)      # fc3_mu
    w3v, b3v = init_linear(keys[3], 64, latent_dim)      # fc3_logvar
    wa1, ba1 = init_linear(keys[4], latent_dim, 32)      # aux_network[0]
    wa2, ba2 = init_linear(keys[5], 32, 1)               # aux_network[2]
    w4, b4 = init_linear(keys[6], latent_dim, 64)        # fc4
    w5, b5 = init_linear(keys[7], 64, 128)               # fc5
    w6, b6 = init_linear(jax.random.fold_in(key, 123), 128, input_dim)  # fc6
    return (w1, b1, w2, b2, w3m, b3m, w3v, b3v,
            wa1, ba1, wa2, ba2, w4, b4, w5, b5, w6, b6)


def icvae_reference(x, eps, params):
    """Pure-JAX reference of the same forward pass (for correctness check)."""
    (w1, b1, w2, b2, w3m, b3m, w3v, b3v,
     wa1, ba1, wa2, ba2, w4, b4, w5, b5, w6, b6) = params
    hp = jax.lax.Precision.HIGHEST
    dot = lambda a, b: jnp.dot(a, b, precision=hp)
    h = jax.nn.relu(dot(x, w1) + b1)
    h = jax.nn.relu(dot(h, w2) + b2)
    mu = dot(h, w3m) + b3m
    logvar = dot(h, w3v) + b3v
    z = mu + eps * jnp.exp(0.5 * logvar)
    hd = jax.nn.relu(dot(z, w4) + b4)
    hd = jax.nn.relu(dot(hd, w5) + b5)
    recon = jax.nn.sigmoid(dot(hd, w6) + b6)
    a = jax.nn.relu(dot(mu, wa1) + ba1)
    kl_weight = jnp.mean(jax.nn.sigmoid(dot(a, wa2) + ba2))
    return recon, mu, logvar, kl_weight


if __name__ == "__main__":
    input_dim = 16
    latent_dim = 2
    batch = 8
    beta_initial = 1.0  # held as a Python attribute in the torch module; unused in forward

    root = jax.random.PRNGKey(0)
    k_params, k_x, k_eps = jax.random.split(root, 3)

    params = make_icvae_params(k_params, input_dim, latent_dim)
    # Data in [0, 1] (BCE target semantics in the original module).
    x = jax.random.uniform(k_x, (batch, input_dim), jnp.float32)
    # TODO(synk): torch.randn_like noise is drawn outside the kernel (explicit eps)
    # so the fused kernel stays deterministic and testable.
    eps = jax.random.normal(k_eps, (batch, latent_dim), jnp.float32)

    recon_x, mu, logvar, kl_weight = icvae_forward(x, eps, params)
    jax.block_until_ready((recon_x, mu, logvar, kl_weight))

    assert recon_x.shape == (batch, input_dim)
    assert mu.shape == (batch, latent_dim)
    assert logvar.shape == (batch, latent_dim)
    assert kl_weight.shape == ()

    # Correctness vs. the pure-JAX reference.
    r_recon, r_mu, r_logvar, r_klw = icvae_reference(x, eps, params)
    for got, want in ((recon_x, r_recon), (mu, r_mu),
                      (logvar, r_logvar), (kl_weight, r_klw)):
        assert jnp.allclose(got, want, atol=1e-3, rtol=1e-3), \
            float(jnp.max(jnp.abs(got - want)))

    print("KERNEL_OK")
</pallas_src>

<mosaic_0001>
module attributes {stable_mosaic.version = 11 : i64} {
  func.func @icvae_kernel(%arg0: i32, %arg1: memref<8x18xf32, #tpu.memory_space<vmem>>, %arg2: memref<128x2048xf32, #tpu.memory_space<vmem>>, %arg3: memref<8x128xf32, #tpu.memory_space<vmem>>) attributes {dimension_semantics = [#tpu.dimension_semantics<parallel>], iteration_bounds = array<i64: 1>, scalar_prefetch = 0 : i64, scratch_operands = 0 : i64, tpu.core_type = #tpu.core_type<tc>, window_params = [{transform_indices = @transform_0, window_bounds = array<i64: 8, 18>}, {pipeline_mode = #tpu.pipeline_mode<synchronous>, transform_indices = @transform_1, window_bounds = array<i64: 128, 2048>}, {transform_indices = @transform_2, window_bounds = array<i64: 8, 128>}]} {
    %c0 = arith.constant 0 : index
    %c0_0 = arith.constant 0 : index
    %0 = vector.load %arg1[%c0, %c0_0] : memref<8x18xf32, #tpu.memory_space<vmem>>, vector<8x18xf32>
    %1 = vector.extract_strided_slice %0 {offsets = [0, 0], sizes = [8, 16], strides = [1, 1]} : vector<8x18xf32> to vector<8x16xf32>
    %2 = vector.extract_strided_slice %0 {offsets = [0, 16], sizes = [8, 2], strides = [1, 1]} : vector<8x18xf32> to vector<8x2xf32>
    %c0_1 = arith.constant 0 : index
    %c0_2 = arith.constant 0 : index
    %3 = vector.load %arg2[%c0_1, %c0_2] : memref<128x2048xf32, #tpu.memory_space<vmem>>, vector<16x128xf32>
    %c0_3 = arith.constant 0 : index
    %c128 = arith.constant 128 : index
    %4 = vector.load %arg2[%c0_3, %c128] : memref<128x2048xf32, #tpu.memory_space<vmem>>, vector<128x64xf32>
    %c0_4 = arith.constant 0 : index
    %c256 = arith.constant 256 : index
    %5 = vector.load %arg2[%c0_4, %c256] : memref<128x2048xf32, #tpu.memory_space<vmem>>, vector<64x4xf32>
    %c0_5 = arith.constant 0 : index
    %c512 = arith.constant 512 : index
    %6 = vector.load %arg2[%c0_5, %c512] : memref<128x2048xf32, #tpu.memory_space<vmem>>, vector<64x128xf32>
    %c0_6 = arith.constant 0 : index
    %c640 = arith.constant 640 : index
    %7 = vector.load %arg2[%c0_6, %c640] : memref<128x2048xf32, #tpu.memory_space<vmem>>, vector<128x16xf32>
    %c0_7 = arith.constant 0 : index
    %c896 = arith.constant 896 : index
    %8 = vector.load %arg2[%c0_7, %c896] : memref<128x2048xf32, #tpu.memory_space<vmem>>, vector<1x32xf32>
    %c0_8 = arith.constant 0 : index
    %c1024 = arith.constant 1024 : index
    %9 = vector.load %arg2[%c0_8, %c1024] : memref<128x2048xf32, #tpu.memory_space<vmem>>, vector<1x128xf32>
    %c0_9 = arith.constant 0 : index
    %c1152 = arith.constant 1152 : index
    %10 = vector.load %arg2[%c0_9, %c1152] : memref<128x2048xf32, #tpu.memory_space<vmem>>, vector<1x64xf32>
    %c0_10 = arith.constant 0 : index
    %c1280 = arith.constant 1280 : index
    %11 = vector.load %arg2[%c0_10, %c1280] : memref<128x2048xf32, #tpu.memory_space<vmem>>, vector<1x4xf32>
    %c0_11 = arith.constant 0 : index
    %c1408 = arith.constant 1408 : index
    %12 = vector.load %arg2[%c0_11, %c1408] : memref<128x2048xf32, #tpu.memory_space<vmem>>, vector<1x64xf32>
    %c0_12 = arith.constant 0 : index
    %c1536 = arith.constant 1536 : index
    %13 = vector.load %arg2[%c0_12, %c1536] : memref<128x2048xf32, #tpu.memory_space<vmem>>, vector<1x128xf32>
    %c0_13 = arith.constant 0 : index
    %c1664 = arith.constant 1664 : index
    %14 = vector.load %arg2[%c0_13, %c1664] : memref<128x2048xf32, #tpu.memory_space<vmem>>, vector<1x16xf32>
    %c0_14 = arith.constant 0 : index
    %c1792 = arith.constant 1792 : index
    %15 = vector.load %arg2[%c0_14, %c1792] : memref<128x2048xf32, #tpu.memory_space<vmem>>, vector<1x32xf32>
    %c0_15 = arith.constant 0 : index
    %c1920 = arith.constant 1920 : index
    %16 = vector.load %arg2[%c0_15, %c1920] : memref<128x2048xf32, #tpu.memory_space<vmem>>, vector<1x1xf32>
    %cst = arith.constant dense<0.000000e+00> : vector<8x128xf32>
    %17 = tpu.matmul %1, %3, %cst {dimension_numbers = #tpu.dot_dimension_numbers<[1], [0], [0], [1], [0, 0, 1, 1], [], []>} : vector<8x16xf32>, vector<16x128xf32>, vector<8x128xf32> -> vector<8x128xf32>
    %18 = vector.broadcast %9 : vector<1x128xf32> to vector<8x128xf32>
    %19 = arith.addf %17, %18 : vector<8x128xf32>
    %cst_16 = arith.constant 0.000000e+00 : f32
    %20 = vector.broadcast %cst_16 : f32 to vector<8x128xf32>
    %21 = arith.maximumf %19, %20 : vector<8x128xf32>
    %cst_17 = arith.constant dense<0.000000e+00> : vector<8x64xf32>
    %22 = tpu.matmul %21, %4, %cst_17 {dimension_numbers = #tpu.dot_dimension_numbers<[1], [0], [0], [1], [0, 0, 1, 1], [], []>} : vector<8x128xf32>, vector<128x64xf32>, vector<8x64xf32> -> vector<8x64xf32>
    %23 = vector.broadcast %10 : vector<1x64xf32> to vector<8x64xf32>
    %24 = arith.addf %22, %23 : vector<8x64xf32>
    %cst_18 = arith.constant 0.000000e+00 : f32
    %25 = vector.broadcast %cst_18 : f32 to vector<8x64xf32>
    %26 = arith.maximumf %24, %25 : vector<8x64xf32>
    %cst_19 = arith.constant dense<0.000000e+00> : vector<8x4xf32>
    %27 = tpu.matmul %26, %5, %cst_19 {dimension_numbers = #tpu.dot_dimension_numbers<[1], [0], [0], [1], [0, 0, 1, 1], [], []>} : vector<8x64xf32>, vector<64x4xf32>, vector<8x4xf32> -> vector<8x4xf32>
    %28 = vector.broadcast %11 : vector<1x4xf32> to vector<8x4xf32>
    %29 = arith.addf %27, %28 : vector<8x4xf32>
    %30 = vector.extract_strided_slice %29 {offsets = [0, 0], sizes = [8, 2], strides = [1, 1]} : vector<8x4xf32> to vector<8x2xf32>
    %31 = vector.extract_strided_slice %29 {offsets = [0, 2], sizes = [8, 2], strides = [1, 1]} : vector<8x4xf32> to vector<8x2xf32>
    %cst_20 = arith.constant 5.000000e-01 : f32
    %32 = vector.broadcast %cst_20 : f32 to vector<8x2xf32>
    %33 = arith.mulf %32, %31 : vector<8x2xf32>
    %34 = math.exp %33 : vector<8x2xf32>
    %35 = arith.mulf %2, %34 : vector<8x2xf32>
    %36 = arith.addf %30, %35 : vector<8x2xf32>
    %c0_21 = arith.constant 0 : index
    %c384 = arith.constant 384 : index
    %37 = vector.load %arg2[%c0_21, %c384] : memref<128x2048xf32, #tpu.memory_space<vmem>>, vector<1x64xf32>
    %c0_22 = arith.constant 0 : index
    %c768 = arith.constant 768 : index
    %38 = vector.load %arg2[%c0_22, %c768] : memref<128x2048xf32, #tpu.memory_space<vmem>>, vector<1x32xf32>
    %39 = vector.extract_strided_slice %36 {offsets = [0, 0], sizes = [8, 1], strides = [1, 1]} : vector<8x2xf32> to vector<8x1xf32>
    %40 = vector.broadcast %39 : vector<8x1xf32> to vector<8x64xf32>
    %41 = vector.broadcast %37 : vector<1x64xf32> to vector<8x64xf32>
    %42 = arith.mulf %40, %41 : vector<8x64xf32>
    %43 = vector.broadcast %12 : vector<1x64xf32> to vector<8x64xf32>
    %44 = arith.addf %43, %42 : vector<8x64xf32>
    %45 = vector.extract_strided_slice %30 {offsets = [0, 0], sizes = [8, 1], strides = [1, 1]} : vector<8x2xf32> to vector<8x1xf32>
    %46 = vector.broadcast %45 : vector<8x1xf32> to vector<8x32xf32>
    %47 = vector.broadcast %38 : vector<1x32xf32> to vector<8x32xf32>
    %48 = arith.mulf %46, %47 : vector<8x32xf32>
    %49 = vector.broadcast %15 : vector<1x32xf32> to vector<8x32xf32>
    %50 = arith.addf %49, %48 : vector<8x32xf32>
    %c1 = arith.constant 1 : index
    %c384_23 = arith.constant 384 : index
    %51 = vector.load %arg2[%c1, %c384_23] : memref<128x2048xf32, #tpu.memory_space<vmem>>, vector<1x64xf32>
    %c1_24 = arith.constant 1 : index
    %c768_25 = arith.constant 768 : index
    %52 = vector.load %arg2[%c1_24, %c768_25] : memref<128x2048xf32, #tpu.memory_space<vmem>>, vector<1x32xf32>
    %53 = vector.extract_strided_slice %36 {offsets = [0, 1], sizes = [8, 1], strides = [1, 1]} : vector<8x2xf32> to vector<8x1xf32>
    %54 = vector.broadcast %53 : vector<8x1xf32> to vector<8x64xf32>
    %55 = vector.broadcast %51 : vector<1x64xf32> to vector<8x64xf32>
    %56 = arith.mulf %54, %55 : vector<8x64xf32>
    %57 = arith.addf %44, %56 : vector<8x64xf32>
    %58 = vector.extract_strided_slice %30 {offsets = [0, 1], sizes = [8, 1], strides = [1, 1]} : vector<8x2xf32> to vector<8x1xf32>
    %59 = vector.broadcast %58 : vector<8x1xf32> to vector<8x32xf32>
    %60 = vector.broadcast %52 : vector<1x32xf32> to vector<8x32xf32>
    %61 = arith.mulf %59, %60 : vector<8x32xf32>
    %62 = arith.addf %50, %61 : vector<8x32xf32>
    %cst_26 = arith.constant 0.000000e+00 : f32
    %63 = vector.broadcast %cst_26 : f32 to vector<8x64xf32>
    %64 = arith.maximumf %57, %63 : vector<8x64xf32>
    %cst_27 = arith.constant dense<0.000000e+00> : vector<8x128xf32>
    %65 = tpu.matmul %64, %6, %cst_27 {dimension_numbers = #tpu.dot_dimension_numbers<[1], [0], [0], [1], [0, 0, 1, 1], [], []>} : vector<8x64xf32>, vector<64x128xf32>, vector<8x128xf32> -> vector<8x128xf32>
    %66 = vector.broadcast %13 : vector<1x128xf32> to vector<8x128xf32>
    %67 = arith.addf %65, %66 : vector<8x128xf32>
    %cst_28 = arith.constant 0.000000e+00 : f32
    %68 = vector.broadcast %cst_28 : f32 to vector<8x128xf32>
    %69 = arith.maximumf %67, %68 : vector<8x128xf32>
    %cst_29 = arith.constant dense<0.000000e+00> : vector<8x16xf32>
    %70 = tpu.matmul %69, %7, %cst_29 {dimension_numbers = #tpu.dot_dimension_numbers<[1], [0], [0], [1], [0, 0, 1, 1], [], []>} : vector<8x128xf32>, vector<128x16xf32>, vector<8x16xf32> -> vector<8x16xf32>
    %71 = vector.broadcast %14 : vector<1x16xf32> to vector<8x16xf32>
    %72 = arith.addf %70, %71 : vector<8x16xf32>
    %73 = math.absf %72 : vector<8x16xf32>
    %cst_30 = arith.constant 0.000000e+00 : f32
    %74 = vector.broadcast %cst_30 : f32 to vector<8x16xf32>
    %75 = arith.subf %74, %73 : vector<8x16xf32>
    %76 = math.exp %75 : vector<8x16xf32>
    %cst_31 = arith.constant 1.000000e+00 : f32
    %77 = vector.broadcast %cst_31 : f32 to vector<8x16xf32>
    %78 = arith.addf %77, %76 : vector<8x16xf32>
    %79 = tpu.reciprocal %78 {approx = true} : vector<8x16xf32> -> vector<8x16xf32>
    %cst_32 = arith.constant 0.000000e+00 : f32
    %80 = vector.broadcast %cst_32 : f32 to vector<8x16xf32>
    %81 = arith.cmpf oge, %72, %80 : vector<8x16xf32>
    %82 = arith.mulf %76, %79 : vector<8x16xf32>
    %83 = arith.select %81, %79, %82 : vector<8x16xi1>, vector<8x16xf32>
    %cst_33 = arith.constant 0.000000e+00 : f32
    %84 = vector.broadcast %cst_33 : f32 to vector<8x32xf32>
    %85 = arith.maximumf %62, %84 : vector<8x32xf32>
    %86 = vector.broadcast %8 : vector<1x32xf32> to vector<8x32xf32>
    %87 = arith.mulf %85, %86 : vector<8x32xf32>
    %cst_34 = arith.constant dense<0.000000e+00> : vector<8xf32>
    %88 = vector.multi_reduction <add>, %87, %cst_34 [1] : vector<8x32xf32> to vector<8xf32>
    %89 = vector.shape_cast %88 : vector<8xf32> to vector<8x1xf32>
    %90 = vector.broadcast %16 : vector<1x1xf32> to vector<8x1xf32>
    %91 = arith.addf %89, %90 : vector<8x1xf32>
    %92 = math.absf %91 : vector<8x1xf32>
    %cst_35 = arith.constant 0.000000e+00 : f32
    %93 = vector.broadcast %cst_35 : f32 to vector<8x1xf32>
    %94 = arith.subf %93, %92 : vector<8x1xf32>
    %95 = math.exp %94 : vector<8x1xf32>
    %cst_36 = arith.constant 1.000000e+00 : f32
    %96 = vector.broadcast %cst_36 : f32 to vector<8x1xf32>
    %97 = arith.addf %96, %95 : vector<8x1xf32>
    %98 = tpu.reciprocal %97 {approx = true} : vector<8x1xf32> -> vector<8x1xf32>
    %cst_37 = arith.constant 0.000000e+00 : f32
    %99 = vector.broadcast %cst_37 : f32 to vector<8x1xf32>
    %100 = arith.cmpf oge, %91, %99 : vector<8x1xf32>
    %101 = arith.mulf %95, %98 : vector<8x1xf32>
    %102 = arith.select %100, %98, %101 : vector<8x1xi1>, vector<8x1xf32>
    %cst_38 = arith.constant 0.000000e+00 : f32
    %103 = vector.broadcast %cst_38 : f32 to vector<8x107xf32>
    %104 = tpu.concatenate %83, %29, %102, %103 in 1 : vector<8x16xf32>, vector<8x4xf32>, vector<8x1xf32>, vector<8x107xf32> -> vector<8x128xf32>
    %c0_39 = arith.constant 0 : index
    %c0_40 = arith.constant 0 : index
    %105 = vector.load %arg3[%c0_39, %c0_40] : memref<8x128xf32, #tpu.memory_space<vmem>>, vector<8x128xf32>
    tpu.vector_store %arg3[%c0_39, %c0_40], %104 {strides = array<i32>} : memref<8x128xf32, #tpu.memory_space<vmem>>, vector<8x128xf32>,
    return
  }
  func.func @transform_0(%arg0: i32) -> (i32, i32) {
    %c0_i32 = arith.constant 0 : i32
    %c0_i32_0 = arith.constant 0 : i32
    return %arg0, %c0_i32 : i32, i32
  }
  func.func @transform_1(%arg0: i32) -> (i32, i32) {
    %c0_i32 = arith.constant 0 : i32
    %c0_i32_0 = arith.constant 0 : i32
    %c0_i32_1 = arith.constant 0 : i32
    return %c0_i32, %c0_i32_0 : i32, i32
  }
  func.func @transform_2(%arg0: i32) -> (i32, i32) {
    %c0_i32 = arith.constant 0 : i32
    %c0_i32_0 = arith.constant 0 : i32
    return %arg0, %c0_i32 : i32, i32
  }
}

</mosaic_0001>

<llo_original>
// kernel: icvae_forward.1
$region0: #{icvae_forward.1}
  #allocation0 [shape = 'u32[]', space=smem, size = 0x4, offset = 0x4, fixed_abs, tag = 'smem constant byte address 0x4 - core index']
  #allocation1 [shape = 'u32[144,128]{1,0:T(1,128)}', space=vmem, size = 0x12000, scoped, tag = 'internal scratch']
  %s0 = inlined_call_operand.vmem [shape: f32[8,18], index: 0, kind: input, shape index: {}]
  %s1 = inlined_call_operand.vmem [shape: f32[128,2048], index: 1, kind: input, shape index: {}]
  %s2 = inlined_call_operand.vmem [shape: f32[8,128], index: 2, kind: output, shape index: {}]
  %s3 = sld [smem:[#allocation0]]
  $region18: #{icvae_forward.1} parent=0
    _
  %s5 = ssub.s32 1, %s3
  %s6 = scalar_select 0, %s5, %s3
  // Predicated region
  $region2: #{icvae_forward.1} parent=0 // pred_check
    _
  $region3: #{icvae_forward.1} parent=0 // pred_check_branch
    %8 = sbr.rel (0) target = $region5
  $region4: #{icvae_forward.1} parent=0 // pred_region
    _
  $region5: #{icvae_forward.1} parent=0 // pred_fallthru
    _
  // Predicated region
  $region6: #{icvae_forward.1} parent=0 // pred_check
    _
  $region7: #{icvae_forward.1} parent=0 // pred_check_branch
    %10 = sbr.rel (0) target = $region9
  $region8: #{icvae_forward.1} parent=0 // pred_region
    _
  $region9: #{icvae_forward.1} parent=0 // pred_fallthru
    _
  %v11 = vld [vmem:[%s0] sm:$0xff]
  %v12 = vld [vmem:[%s1] sm:$0xff]
  %v13 = vld [vmem:[%s1 + $0x80] sm:$0xff]
  %v14 = vld [vmem:[%s1 + $0x8] sm:$0xff]
  %v15 = vld [vmem:[%s1 + $0x88] sm:$0xff]
  %v16 = vld [vmem:[%s1 + $0x108] sm:$0xff]
  %v17 = vld [vmem:[%s1 + $0x188] sm:$0xff]
  %v18 = vld [vmem:[%s1 + $0x208] sm:$0xff]
  %v19 = vld [vmem:[%s1 + $0x288] sm:$0xff]
  %v20 = vld [vmem:[%s1 + $0x308] sm:$0xff]
  %v21 = vld [vmem:[%s1 + $0x388] sm:$0xff]
  %v22 = vld [vmem:[%s1 + $0x408] sm:$0xff]
  %v23 = vld [vmem:[%s1 + $0x488] sm:$0xff]
  %v24 = vld [vmem:[%s1 + $0x508] sm:$0xff]
  %v25 = vld [vmem:[%s1 + $0x588] sm:$0xff]
  %v26 = vld [vmem:[%s1 + $0x608] sm:$0xff]
  %v27 = vld [vmem:[%s1 + $0x688] sm:$0xff]
  %v28 = vld [vmem:[%s1 + $0x708] sm:$0xff]
  %v29 = vld [vmem:[%s1 + $0x788] sm:$0xff]
  %v30 = vld [vmem:[%s1 + $0x10] sm:$0xff]
  %v31 = vld [vmem:[%s1 + $0x90] sm:$0xff]
  %v32 = vld [vmem:[%s1 + $0x110] sm:$0xff]
  %v33 = vld [vmem:[%s1 + $0x190] sm:$0xff]
  %v34 = vld [vmem:[%s1 + $0x210] sm:$0xff]
  %v35 = vld [vmem:[%s1 + $0x290] sm:$0xff]
  %v36 = vld [vmem:[%s1 + $0x310] sm:$0xff]
  %v37 = vld [vmem:[%s1 + $0x390] sm:$0xff]
  %v38 = vld [vmem:[%s1 + $0x20] sm:$0xff]
  %v39 = vld [vmem:[%s1 + $0xa0] sm:$0xff]
  %v40 = vld [vmem:[%s1 + $0x120] sm:$0xff]
  %v41 = vld [vmem:[%s1 + $0x1a0] sm:$0xff]
  %v42 = vld [vmem:[%s1 + $0x220] sm:$0xff]
  %v43 = vld [vmem:[%s1 + $0x2a0] sm:$0xff]
  %v44 = vld [vmem:[%s1 + $0x320] sm:$0xff]
  %v45 = vld [vmem:[%s1 + $0x3a0] sm:$0xff]
  %v46 = vld [vmem:[%s1 + $0x28] sm:$0xff]
  %v47 = vld [vmem:[%s1 + $0xa8] sm:$0xff]
  %v48 = vld [vmem:[%s1 + $0x128] sm:$0xff]
  %v49 = vld [vmem:[%s1 + $0x1a8] sm:$0xff]
  %v50 = vld [vmem:[%s1 + $0x228] sm:$0xff]
  %v51 = vld [vmem:[%s1 + $0x2a8] sm:$0xff]
  %v52 = vld [vmem:[%s1 + $0x328] sm:$0xff]
  %v53 = vld [vmem:[%s1 + $0x3a8] sm:$0xff]
  %v54 = vld [vmem:[%s1 + $0x428] sm:$0xff]
  %v55 = vld [vmem:[%s1 + $0x4a8] sm:$0xff]
  %v56 = vld [vmem:[%s1 + $0x528] sm:$0xff]
  %v57 = vld [vmem:[%s1 + $0x5a8] sm:$0xff]
  %v58 = vld [vmem:[%s1 + $0x628] sm:$0xff]
  %v59 = vld [vmem:[%s1 + $0x6a8] sm:$0xff]
  %v60 = vld [vmem:[%s1 + $0x728] sm:$0xff]
  %v61 = vld [vmem:[%s1 + $0x7a8] sm:$0xff]
  %v62 = vld [vmem:[%s1 + $0x38] ss:$0 sm:$0xff]
  %v63 = vld [vmem:[%s1 + $0x40] ss:$0 sm:$0xff]
  %v64 = vld [vmem:[%s1 + $0x48] ss:$0 sm:$0xff]
  %v65 = vld [vmem:[%s1 + $0x50] ss:$0 sm:$0xff]
  %v66 = vld [vmem:[%s1 + $0x58] ss:$0 sm:$0xff]
  %v67 = vld [vmem:[%s1 + $0x60] ss:$0 sm:$0xff]
  %v68 = vld [vmem:[%s1 + $0x68] ss:$0 sm:$0xff]
  %v69 = vld [vmem:[%s1 + $0x70] ss:$0 sm:$0xff]
  %v70 = vld [vmem:[%s1 + $0x78] ss:$0 sm:$0xff]
  %vm71 = vcmask 130048
  %v73 = vsel %vm71, %v11, 0
  %75 = vmatprep.subr.mxu0 0.0
  %76 = vmatpush1.msra.mxu0 %v12
  %77 = vmatprep.subr.mxu0 0.0
  %78 = vmatpush1.msra.mxu0 %v13
  %79 = vmatprep.subr.mxu0 0.0
  %80 = vmatpush1.msra.mxu0 0.0
  %81 = vmatprep.subr.mxu0 0.0
  %82 = vmatpush1.msra.mxu0 0.0
  %83 = vmatprep.subr.mxu0 0.0
  %84 = vmatpush1.msra.mxu0 0.0
  %85 = vmatprep.subr.mxu0 0.0
  %86 = vmatpush1.msra.mxu0 0.0
  %87 = vmatprep.subr.mxu0 0.0
  %88 = vmatpush1.msra.mxu0 0.0
  %89 = vmatprep.subr.mxu0 0.0
  %90 = vmatpush1.msra.mxu0 0.0
  %91 = vmatprep.subr.mxu0 0.0
  %92 = vmatpush1.msra.mxu0 0.0
  %93 = vmatprep.subr.mxu0 0.0
  %94 = vmatpush1.msra.mxu0 0.0
  %95 = vmatprep.subr.mxu0 0.0
  %96 = vmatpush1.msra.mxu0 0.0
  %97 = vmatprep.subr.mxu0 0.0
  %98 = vmatpush1.msra.mxu0 0.0
  %99 = vmatprep.subr.mxu0 0.0
  %100 = vmatpush1.msra.mxu0 0.0
  %101 = vmatprep.subr.mxu0 0.0
  %102 = vmatpush1.msra.mxu0 0.0
  %103 = vmatprep.subr.mxu0 0.0
  %104 = vmatpush1.msra.mxu0 0.0
  %105 = vmatprep.subr.mxu0 0.0
  %106 = vmatpush1.msra.mxu0 0.0
  %107 = vmatprep.subr.mxu0 0.0
  %108 = vmatpush1.msra.mxu0 0.0
  %109 = vmatprep.subr.mxu0 0.0
  %110 = vmatpush1.msra.mxu0 0.0
  %111 = vmatprep.subr.mxu0 0.0
  %112 = vmatpush1.msra.mxu0 0.0
  %113 = vmatprep.subr.mxu0 0.0
  %114 = vmatpush1.msra.mxu0 0.0
  %115 = vmatprep.subr.mxu0 0.0
  %116 = vmatpush1.msra.mxu0 0.0
  %117 = vmatprep.subr.mxu0 0.0
  %118 = vmatpush1.msra.mxu0 0.0
  %119 = vmatprep.subr.mxu0 0.0
  %120 = vmatpush1.msra.mxu0 0.0
  %121 = vmatprep.subr.mxu0 0.0
  %122 = vmatpush1.msra.mxu0 0.0
  %123 = vmatprep.subr.mxu0 0.0
  %124 = vmatpush1.msra.mxu0 0.0
  %125 = vmatprep.subr.mxu0 0.0
  %126 = vmatpush1.msra.mxu0 0.0
  %127 = vmatprep.subr.mxu0 0.0
  %128 = vmatpush1.msra.mxu0 0.0
  %129 = vmatprep.subr.mxu0 0.0
  %130 = vmatpush1.msra.mxu0 0.0
  %131 = vmatprep.subr.mxu0 0.0
  %132 = vmatpush1.msra.mxu0 0.0
  %133 = vmatprep.subr.mxu0 0.0
  %134 = vmatpush1.msra.mxu0 0.0
  %135 = vmatprep.subr.mxu0 0.0
  %136 = vmatpush1.msra.mxu0 0.0
  %137 = vmatprep.subr.mxu0 0.0
  %138 = vmatpush1.msra.mxu0 0.0
  %139 = vmatprep.mubr.f32.mxu0 0.0
  %140 = vmatmul.mubr.f32.gmra.mrb[0].mxu0 %v73
  %v141 = vpop.f32.mrb[0].mxu0
  %v142 = vadd.f32 %v63, %v141
  %v143 = vpop.f32.mrb[0].mxu0
  %144 = vdwg.mxu0
  %v145 = vmax.f32 %v142, 0.0
  %146 = vmatprep.subr.mxu0 0.0
  %147 = vmatpush1.msra.mxu0 %v14
  %148 = vmatprep.subr.mxu0 0.0
  %149 = vmatpush1.msra.mxu0 %v15
  %150 = vmatprep.subr.mxu0 0.0
  %151 = vmatpush1.msra.mxu0 %v16
  %152 = vmatprep.subr.mxu0 0.0
  %153 = vmatpush1.msra.mxu0 %v17
  %154 = vmatprep.subr.mxu0 0.0
  %155 = vmatpush1.msra.mxu0 %v18
  %156 = vmatprep.subr.mxu0 0.0
  %157 = vmatpush1.msra.mxu0 %v19
  %158 = vmatprep.subr.mxu0 0.0
  %159 = vmatpush1.msra.mxu0 %v20
  %160 = vmatprep.subr.mxu0 0.0
  %161 = vmatpush1.msra.mxu0 %v21
  %162 = vmatprep.subr.mxu0 0.0
  %163 = vmatpush1.msra.mxu0 %v22
  %164 = vmatprep.subr.mxu0 0.0
  %165 = vmatpush1.msra.mxu0 %v23
  %166 = vmatprep.subr.mxu0 0.0
  %167 = vmatpush1.msra.mxu0 %v24
  %168 = vmatprep.subr.mxu0 0.0
  %169 = vmatpush1.msra.mxu0 %v25
  %170 = vmatprep.subr.mxu0 0.0
  %171 = vmatpush1.msra.mxu0 %v26
  %172 = vmatprep.subr.mxu0 0.0
  %173 = vmatpush1.msra.mxu0 %v27
  %174 = vmatprep.subr.mxu0 0.0
  %175 = vmatpush1.msra.mxu0 %v28
  %176 = vmatprep.subr.mxu0 0.0
  %177 = vmatpush1.msra.mxu0 %v29
  %178 = vmatprep.subr.mxu0 0.0
  %179 = vmatpush1.msra.mxu0 0.0
  %180 = vmatprep.subr.mxu0 0.0
  %181 = vmatpush1.msra.mxu0 0.0
  %182 = vmatprep.subr.mxu0 0.0
  %183 = vmatpush1.msra.mxu0 0.0
  %184 = vmatprep.subr.mxu0 0.0
  %185 = vmatpush1.msra.mxu0 0.0
  %186 = vmatprep.subr.mxu0 0.0
  %187 = vmatpush1.msra.mxu0 0.0
  %188 = vmatprep.subr.mxu0 0.0
  %189 = vmatpush1.msra.mxu0 0.0
  %190 = vmatprep.subr.mxu0 0.0
  %191 = vmatpush1.msra.mxu0 0.0
  %192 = vmatprep.subr.mxu0 0.0
  %193 = vmatpush1.msra.mxu0 0.0
  %194 = vmatprep.subr.mxu0 0.0
  %195 = vmatpush1.msra.mxu0 0.0
  %196 = vmatprep.subr.mxu0 0.0
  %197 = vmatpush1.msra.mxu0 0.0
  %198 = vmatprep.subr.mxu0 0.0
  %199 = vmatpush1.msra.mxu0 0.0
  %200 = vmatprep.subr.mxu0 0.0
  %201 = vmatpush1.msra.mxu0 0.0
  %202 = vmatprep.subr.mxu0 0.0
  %203 = vmatpush1.msra.mxu0 0.0
  %204 = vmatprep.subr.mxu0 0.0
  %205 = vmatpush1.msra.mxu0 0.0
  %206 = vmatprep.subr.mxu0 0.0
  %207 = vmatpush1.msra.mxu0 0.0
  %208 = vmatprep.subr.mxu0 0.0
  %209 = vmatpush1.msra.mxu0 0.0
  %210 = vmatprep.mubr.f32.mxu0 0.0
  %211 = vmatmul.mubr.f32.gmra.mrb[0].mxu0 %v145
  %v212 = vpop.f32.mrb[0].mxu0
  %v213 = vadd.f32 %v64, %v212
  %v214 = vpop.f32.mrb[0].mxu0
  %215 = vdwg.mxu0
  %v216 = vmax.f32 %v213, 0.0
  %vm217 = vcmask 523264
  %v219 = vsel %vm217, %v216, 0
  %221 = vmatprep.subr.mxu0 0.0
  %222 = vmatpush1.msra.mxu0 %v30
  %223 = vmatprep.subr.mxu0 0.0
  %224 = vmatpush1.msra.mxu0 %v31
  %225 = vmatprep.subr.mxu0 0.0
  %226 = vmatpush1.msra.mxu0 %v32
  %227 = vmatprep.subr.mxu0 0.0
  %228 = vmatpush1.msra.mxu0 %v33
  %229 = vmatprep.subr.mxu0 0.0
  %230 = vmatpush1.msra.mxu0 %v34
  %231 = vmatprep.subr.mxu0 0.0
  %232 = vmatpush1.msra.mxu0 %v35
  %233 = vmatprep.subr.mxu0 0.0
  %234 = vmatpush1.msra.mxu0 %v36
  %235 = vmatprep.subr.mxu0 0.0
  %236 = vmatpush1.msra.mxu0 %v37
  %237 = vmatprep.subr.mxu0 0.0
  %238 = vmatpush1.msra.mxu0 0.0
  %239 = vmatprep.subr.mxu0 0.0
  %240 = vmatpush1.msra.mxu0 0.0
  %241 = vmatprep.subr.mxu0 0.0
  %242 = vmatpush1.msra.mxu0 0.0
  %243 = vmatprep.subr.mxu0 0.0
  %244 = vmatpush1.msra.mxu0 0.0
  %245 = vmatprep.subr.mxu0 0.0
  %246 = vmatpush1.msra.mxu0 0.0
  %247 = vmatprep.subr.mxu0 0.0
  %248 = vmatpush1.msra.mxu0 0.0
  %249 = vmatprep.subr.mxu0 0.0
  %250 = vmatpush1.msra.mxu0 0.0
  %251 = vmatprep.subr.mxu0 0.0
  %252 = vmatpush1.msra.mxu0 0.0
  %253 = vmatprep.subr.mxu0 0.0
  %254 = vmatpush1.msra.mxu0 0.0
  %255 = vmatprep.subr.mxu0 0.0
  %256 = vmatpush1.msra.mxu0 0.0
  %257 = vmatprep.subr.mxu0 0.0
  %258 = vmatpush1.msra.mxu0 0.0
  %259 = vmatprep.subr.mxu0 0.0
  %260 = vmatpush1.msra.mxu0 0.0
  %261 = vmatprep.subr.mxu0 0.0
  %262 = vmatpush1.msra.mxu0 0.0
  %263 = vmatprep.subr.mxu0 0.0
  %264 = vmatpush1.msra.mxu0 0.0
  %265 = vmatprep.subr.mxu0 0.0
  %266 = vmatpush1.msra.mxu0 0.0
  %267 = vmatprep.subr.mxu0 0.0
  %268 = vmatpush1.msra.mxu0 0.0
  %269 = vmatprep.subr.mxu0 0.0
  %270 = vmatpush1.msra.mxu0 0.0
  %271 = vmatprep.subr.mxu0 0.0
  %272 = vmatpush1.msra.mxu0 0.0
  %273 = vmatprep.subr.mxu0 0.0
  %274 = vmatpush1.msra.mxu0 0.0
  %275 = vmatprep.subr.mxu0 0.0
  %276 = vmatpush1.msra.mxu0 0.0
  %277 = vmatprep.subr.mxu0 0.0
  %278 = vmatpush1.msra.mxu0 0.0
  %279 = vmatprep.subr.mxu0 0.0
  %280 = vmatpush1.msra.mxu0 0.0
  %281 = vmatprep.subr.mxu0 0.0
  %282 = vmatpush1.msra.mxu0 0.0
  %283 = vmatprep.subr.mxu0 0.0
  %284 = vmatpush1.msra.mxu0 0.0
  %285 = vmatprep.mubr.f32.mxu0 0.0
  %286 = vmatmul.mubr.f32.gmra.mrb[0].mxu0 %v219
  %v287 = vpop.f32.mrb[0].mxu0
  %v288 = vadd.f32 %v65, %v287
  %v289 = vpop.f32.mrb[0].mxu0
  %290 = vdwg.mxu0
  %v291 = vmul.f32 %v288, 0.5
  %v292 = vmul.f32 %v291, 1.442695
  %v293 = vpow.pop %v292
  %295 = vrot.lane.b32.xlu0 %v293, 14
  %v296 = vpop.permute.xlu0 %295
  %v298 = vmul.f32 %v11, %v296
  %300 = vrot.lane.b32.xlu0 %v298, 112
  %v301 = vpop.permute.xlu0 %300
  %v303 = vadd.f32 %v288, %v301
  %v304 = vld [vmem:[%s1 + $0x18] ss:$0 sm:$0xff]
  %v305 = vld [vmem:[%s1 + $0x30] ss:$0 sm:$0xff]
  %307 = vset.pattern.permute.xlu0 0
  %308 = vperm.xlu0 %307, %v303
  %v309 = vpop.permute.xlu0 %308
  %v311 = vmul.f32 %v309, %v304
  %v312 = vadd.f32 %v66, %v311
  %314 = vset.pattern.permute.xlu0 0
  %315 = vperm.xlu0 %314, %v288
  %v316 = vpop.permute.xlu0 %315
  %v318 = vmul.f32 %v316, %v305
  %v319 = vadd.f32 %v69, %v318
  %v320 = vld [vmem:[%s1 + $0x19] ss:$0 sm:$0xff]
  %v321 = vld [vmem:[%s1 + $0x31] ss:$0 sm:$0xff]
  %322 = vset.pattern.permute.xlu0 1
  %323 = vperm.xlu0 %322, %v303
  %v324 = vpop.permute.xlu0 %323
  %v326 = vmul.f32 %v324, %v320
  %v327 = vadd.f32 %v312, %v326
  %328 = vset.pattern.permute.xlu0 1
  %329 = vperm.xlu0 %328, %v288
  %v330 = vpop.permute.xlu0 %329
  %v332 = vmul.f32 %v330, %v321
  %v333 = vadd.f32 %v319, %v332
  %v334 = vmax.f32 %v327, 0.0
  %v336 = vsel %vm217, %v334, 0
  %338 = vmatprep.subr.mxu0 0.0
  %339 = vmatpush1.msra.mxu0 %v38
  %340 = vmatprep.subr.mxu0 0.0
  %341 = vmatpush1.msra.mxu0 %v39
  %342 = vmatprep.subr.mxu0 0.0
  %343 = vmatpush1.msra.mxu0 %v40
  %344 = vmatprep.subr.mxu0 0.0
  %345 = vmatpush1.msra.mxu0 %v41
  %346 = vmatprep.subr.mxu0 0.0
  %347 = vmatpush1.msra.mxu0 %v42
  %348 = vmatprep.subr.mxu0 0.0
  %349 = vmatpush1.msra.mxu0 %v43
  %350 = vmatprep.subr.mxu0 0.0
  %351 = vmatpush1.msra.mxu0 %v44
  %352 = vmatprep.subr.mxu0 0.0
  %353 = vmatpush1.msra.mxu0 %v45
  %354 = vmatprep.subr.mxu0 0.0
  %355 = vmatpush1.msra.mxu0 0.0
  %356 = vmatprep.subr.mxu0 0.0
  %357 = vmatpush1.msra.mxu0 0.0
  %358 = vmatprep.subr.mxu0 0.0
  %359 = vmatpush1.msra.mxu0 0.0
  %360 = vmatprep.subr.mxu0 0.0
  %361 = vmatpush1.msra.mxu0 0.0
  %362 = vmatprep.subr.mxu0 0.0
  %363 = vmatpush1.msra.mxu0 0.0
  %364 = vmatprep.subr.mxu0 0.0
  %365 = vmatpush1.msra.mxu0 0.0
  %366 = vmatprep.subr.mxu0 0.0
  %367 = vmatpush1.msra.mxu0 0.0
  %368 = vmatprep.subr.mxu0 0.0
  %369 = vmatpush1.msra.mxu0 0.0
  %370 = vmatprep.subr.mxu0 0.0
  %371 = vmatpush1.msra.mxu0 0.0
  %372 = vmatprep.subr.mxu0 0.0
  %373 = vmatpush1.msra.mxu0 0.0
  %374 = vmatprep.subr.mxu0 0.0
  %375 = vmatpush1.msra.mxu0 0.0
  %376 = vmatprep.subr.mxu0 0.0
  %377 = vmatpush1.msra.mxu0 0.0
  %378 = vmatprep.subr.mxu0 0.0
  %379 = vmatpush1.msra.mxu0 0.0
  %380 = vmatprep.subr.mxu0 0.0
  %381 = vmatpush1.msra.mxu0 0.0
  %382 = vmatprep.subr.mxu0 0.0
  %383 = vmatpush1.msra.mxu0 0.0
  %384 = vmatprep.subr.mxu0 0.0
  %385 = vmatpush1.msra.mxu0 0.0
  %386 = vmatprep.subr.mxu0 0.0
  %387 = vmatpush1.msra.mxu0 0.0
  %388 = vmatprep.subr.mxu0 0.0
  %389 = vmatpush1.msra.mxu0 0.0
  %390 = vmatprep.subr.mxu0 0.0
  %391 = vmatpush1.msra.mxu0 0.0
  %392 = vmatprep.subr.mxu0 0.0
  %393 = vmatpush1.msra.mxu0 0.0
  %394 = vmatprep.subr.mxu0 0.0
  %395 = vmatpush1.msra.mxu0 0.0
  %396 = vmatprep.subr.mxu0 0.0
  %397 = vmatpush1.msra.mxu0 0.0
  %398 = vmatprep.subr.mxu0 0.0
  %399 = vmatpush1.msra.mxu0 0.0
  %400 = vmatprep.subr.mxu0 0.0
  %401 = vmatpush1.msra.mxu0 0.0
  %402 = vmatprep.mubr.f32.mxu0 0.0
  %403 = vmatmul.mubr.f32.gmra.mrb[0].mxu0 %v336
  %v404 = vpop.f32.mrb[0].mxu0
  %v405 = vadd.f32 %v67, %v404
  %v406 = vpop.f32.mrb[0].mxu0
  %407 = vdwg.mxu0
  %v408 = vmax.f32 %v405, 0.0
  %409 = vmatprep.subr.mxu0 0.0
  %410 = vmatpush1.msra.mxu0 %v46
  %411 = vmatprep.subr.mxu0 0.0
  %412 = vmatpush1.msra.mxu0 %v47
  %413 = vmatprep.subr.mxu0 0.0
  %414 = vmatpush1.msra.mxu0 %v48
  %415 = vmatprep.subr.mxu0 0.0
  %416 = vmatpush1.msra.mxu0 %v49
  %417 = vmatprep.subr.mxu0 0.0
  %418 = vmatpush1.msra.mxu0 %v50
  %419 = vmatprep.subr.mxu0 0.0
  %420 = vmatpush1.msra.mxu0 %v51
  %421 = vmatprep.subr.mxu0 0.0
  %422 = vmatpush1.msra.mxu0 %v52
  %423 = vmatprep.subr.mxu0 0.0
  %424 = vmatpush1.msra.mxu0 %v53
  %425 = vmatprep.subr.mxu0 0.0
  %426 = vmatpush1.msra.mxu0 %v54
  %427 = vmatprep.subr.mxu0 0.0
  %428 = vmatpush1.msra.mxu0 %v55
  %429 = vmatprep.subr.mxu0 0.0
  %430 = vmatpush1.msra.mxu0 %v56
  %431 = vmatprep.subr.mxu0 0.0
  %432 = vmatpush1.msra.mxu0 %v57
  %433 = vmatprep.subr.mxu0 0.0
  %434 = vmatpush1.msra.mxu0 %v58
  %435 = vmatprep.subr.mxu0 0.0
  %436 = vmatpush1.msra.mxu0 %v59
  %437 = vmatprep.subr.mxu0 0.0
  %438 = vmatpush1.msra.mxu0 %v60
  %439 = vmatprep.subr.mxu0 0.0
  %440 = vmatpush1.msra.mxu0 %v61
  %441 = vmatprep.subr.mxu0 0.0
  %442 = vmatpush1.msra.mxu0 0.0
  %443 = vmatprep.subr.mxu0 0.0
  %444 = vmatpush1.msra.mxu0 0.0
  %445 = vmatprep.subr.mxu0 0.0
  %446 = vmatpush1.msra.mxu0 0.0
  %447 = vmatprep.subr.mxu0 0.0
  %448 = vmatpush1.msra.mxu0 0.0
  %449 = vmatprep.subr.mxu0 0.0
  %450 = vmatpush1.msra.mxu0 0.0
  %451 = vmatprep.subr.mxu0 0.0
  %452 = vmatpush1.msra.mxu0 0.0
  %453 = vmatprep.subr.mxu0 0.0
  %454 = vmatpush1.msra.mxu0 0.0
  %455 = vmatprep.subr.mxu0 0.0
  %456 = vmatpush1.msra.mxu0 0.0
  %457 = vmatprep.subr.mxu0 0.0
  %458 = vmatpush1.msra.mxu0 0.0
  %459 = vmatprep.subr.mxu0 0.0
  %460 = vmatpush1.msra.mxu0 0.0
  %461 = vmatprep.subr.mxu0 0.0
  %462 = vmatpush1.msra.mxu0 0.0
  %463 = vmatprep.subr.mxu0 0.0
  %464 = vmatpush1.msra.mxu0 0.0
  %465 = vmatprep.subr.mxu0 0.0
  %466 = vmatpush1.msra.mxu0 0.0
  %467 = vmatprep.subr.mxu0 0.0
  %468 = vmatpush1.msra.mxu0 0.0
  %469 = vmatprep.subr.mxu0 0.0
  %470 = vmatpush1.msra.mxu0 0.0
  %471 = vmatprep.subr.mxu0 0.0
  %472 = vmatpush1.msra.mxu0 0.0
  %473 = vmatprep.mubr.f32.mxu0 0.0
  %474 = vmatmul.mubr.f32.gmra.mrb[0].mxu0 %v408
  %v475 = vpop.f32.mrb[0].mxu0
  %v476 = vadd.f32 %v68, %v475
  %v477 = vpop.f32.mrb[0].mxu0
  %478 = vdwg.mxu0
  %v479 = vand.u32 2147483647, %v476
  %v480 = vsub.f32 0.0, %v479
  %v481 = vmul.f32 %v480, 1.442695
  %v482 = vpow.pop %v481
  %v483 = vadd.f32 %v482, 1.0
  %v484 = vrcp.pop %v483
  %vm485 = vcmp.ge.f32.partialorder %v476, 0.0
  %v486 = vmul.f32 %v482, %v484
  %v487 = vsel %vm485, %v484, %v486
  %v488 = vmax.f32 %v333, 0.0
  %v489 = vmul.f32 %v488, %v62
  %vm490 = vcmask 261120
  %v491 = vsel %vm490, %v489, 0.0
  %492 = vadd.xlane.f32.xlu0 %v491
  %v493 = vpop.xlane.xlu0 %492
  %v494 = vadd.f32 %v493, %v70
  %v495 = vand.u32 2147483647, %v494
  %v496 = vsub.f32 0.0, %v495
  %v497 = vmul.f32 %v496, 1.442695
  %v498 = vpow.pop %v497
  %v499 = vadd.f32 %v498, 1.0
  %v500 = vrcp.pop %v499
  %vm501 = vcmp.ge.f32.partialorder %v494, 0.0
  %v502 = vmul.f32 %v498, %v500
  %v503 = vsel %vm501, %v500, %v502
  %504 = vrot.lane.b32.xlu0 %v288, 16
  %v505 = vpop.permute.xlu0 %504
  %508 = vrot.lane.b32.xlu0 %v503, 20
  %v509 = vpop.permute.xlu0 %508
  %v511 = vsel %vm71, %v487, %v505
  %vm512 = vcmask 162816
  %v513 = vsel %vm512, %v511, %v509
  %vm514 = vcmask 171008
  %v515 = vsel %vm514, %v513, 0.0
  %516 = vst [vmem:[%s2] sm:$0xff] %v515
  // Predicated region
  $region10: #{icvae_forward.1} parent=0 // pred_check
    _
  $region11: #{icvae_forward.1} parent=0 // pred_check_branch
    %518 = sbr.rel (0) target = $region13
  $region12: #{icvae_forward.1} parent=0 // pred_region
    _
  $region13: #{icvae_forward.1} parent=0 // pred_fallthru
    _
  // Predicated region
  $region14: #{icvae_forward.1} parent=0 // pred_check
    _
  $region15: #{icvae_forward.1} parent=0 // pred_check_branch
    %520 = sbr.rel (0) target = $region17
  $region16: #{icvae_forward.1} parent=0 // pred_region
    _
  $region17: #{icvae_forward.1} parent=0 // pred_fallthru
    _

</llo_original>
